<compile_context>
chip_gen: v7x
topology: tpu7x:2x2x1
jax: 0.10.0
libtpu: 0.0.40
codegen_flags: <defaults>
</compile_context>

<pallas_src>
import jax
import jax.numpy as jnp
from jax.experimental import pallas as pl
from jax.experimental.pallas import tpu as pltpu


def _abw_kernel(scal_ref, x_ref, fcw_ref, fcb_ref, o_ref, mpad_ref):
    # scal_ref : SMEM (8,) f32 = [conv tap 0..6, conv bias]
    # x_ref    : VMEM (1, C, HW) tile — one batch element per grid step
    # fcw_ref  : VMEM (C, C) = Linear.weight.T   (resident: constant index_map)
    # fcb_ref  : VMEM (1, C)                     (resident)
    # o_ref    : VMEM (1, C, HW) output tile
    # mpad_ref : VMEM (1, C + 6) scratch — zero-padded per-channel means
    xf = x_ref[...].astype(jnp.float32)                    # (1, C, HW)
    C = xf.shape[1]

    # Global average pool == per-channel mean over the flattened spatial dim
    # (1/HW is a trace-time constant, so this is a single XLU reduce + VPU mul).
    means = jnp.sum(xf, axis=-1) * (1.0 / xf.shape[2])     # (1, C)

    # Conv1d(1, 1, 7, padding=3) along the channel axis as 7 shifted FMAs over
    # a zero-padded row (taps are scalars in SMEM; VPU work only).
    mpad_ref[...] = jnp.zeros_like(mpad_ref)
    mpad_ref[:, 3:3 + C] = means
    conv = scal_ref[7] + jnp.zeros((1, C), jnp.float32)    # start with bias
    for k in range(7):                                     # unrolled at trace time
        # conv[i] += tap[k] * means[i + k - 3]   (zero outside [0, C))
        conv = conv + scal_ref[k] * mpad_ref[:, k:k + C]

    # LeakyReLU (PyTorch default negative_slope = 0.01).
    conv = jnp.where(conv >= 0, conv, 0.01 * conv)

    # fc: Linear(C, C):  y = x @ W.T + b   (fcw_ref already holds W.T).
    fc = jnp.dot(conv, fcw_ref[...],
                 preferred_element_type=jnp.float32) + fcb_ref[...]
    s = jax.nn.sigmoid(fc)                                 # (1, C)

    # WEP: per-batch min/max normalization over the channel dim.
    mx = jnp.max(s, axis=1, keepdims=True)
    mn = jnp.min(s, axis=1, keepdims=True)
    # Mirrors the PyTorch module exactly (no epsilon): NaN if all channels equal.
    w = (s - mn) * pl.reciprocal(mx - mn, approx=True)     # (1, C)

    # Broadcast the per-channel weight across the lane-dense spatial dim.
    o_ref[...] = (xf * w[:, :, None]).astype(o_ref.dtype)


def abw_basic_block(x, conv1d_w, conv1d_b, fc_w, fc_b):
    """x: (B, C, H, W), H == W == patch_size. Returns the ABW-weighted x."""
    B, C, H, W = x.shape
    assert H == W, "module requires square patches (H == W == patch_size)"
    HW = H * W
    x3 = x.reshape(B, C, HW)

    # Parameter glue (plain JAX): 7 conv taps + conv bias packed for SMEM,
    # fc weight transposed so the kernel computes y = x @ W.T + b directly.
    scal = jnp.concatenate([conv1d_w.reshape(7).astype(jnp.float32),
                            conv1d_b.reshape(1).astype(jnp.float32)])
    fc_w_t = fc_w.T.astype(jnp.float32)
    fc_b2 = fc_b.reshape(1, C).astype(jnp.float32)

    # VMEM sizing: (in + out) tiles double-buffered + resident weights + slack.
    itemsize = jnp.dtype(x.dtype).itemsize
    tile_bytes = C * HW * itemsize
    weight_bytes = C * C * 4 + C * 4
    needed = 4 * tile_bytes + 2 * weight_bytes + (2 << 20)
    # TODO(synk): if `needed` exceeds the v7x budget (~48 MiB of its 64 MiB
    # VMEM), switch to a two-pass structure: (1) spatially tiled reduction to
    # per-(B, C) means + tiny w computation, (2) spatially tiled x * w apply.
    if needed > (48 << 20):
        raise ValueError("per-batch tile too large for VMEM; needs two-pass tiling")
    vmem_limit = int(min(max(needed, 4 << 20), 64 << 20))

    out3 = pl.pallas_call(
        _abw_kernel,
        out_shape=jax.ShapeDtypeStruct((B, C, HW), x.dtype),
        grid=(B,),
        in_specs=[
            pl.BlockSpec(memory_space=pltpu.MemorySpace.SMEM),   # taps + bias
            pl.BlockSpec((1, C, HW), lambda b: (b, 0, 0)),       # x, per batch
            pl.BlockSpec((C, C), lambda b: (0, 0)),              # fc W.T (resident)
            pl.BlockSpec((1, C), lambda b: (0, 0)),              # fc bias (resident)
        ],
        out_specs=pl.BlockSpec((1, C, HW), lambda b: (b, 0, 0)),
        scratch_shapes=[pltpu.VMEM((1, C + 6), jnp.float32)],    # padded means
        compiler_params=pltpu.CompilerParams(
            dimension_semantics=("parallel",),
            vmem_limit_bytes=vmem_limit),
    )(scal, x3, fc_w_t, fc_b2)

    return out3.reshape(B, C, H, W)


def _ref_forward(x, conv1d_w, conv1d_b, fc_w, fc_b):
    """Pure-JAX reference mirroring the PyTorch forward."""
    B, C, H, W = x.shape
    means = jnp.mean(x, axis=(2, 3))                  # AvgPool2d(H) -> (B, C)
    padded = jnp.pad(means, ((0, 0), (3, 3)))
    conv = jnp.zeros((B, C), jnp.float32)
    w7 = conv1d_w.reshape(7)
    for k in range(7):
        conv = conv + w7[k] * padded[:, k:k + C]
    conv = conv + conv1d_b[0]
    conv = jnp.where(conv >= 0, conv, 0.01 * conv)    # LeakyReLU
    fc = conv @ fc_w.T + fc_b
    s = jax.nn.sigmoid(fc)
    mx = jnp.max(s, axis=1, keepdims=True)
    mn = jnp.min(s, axis=1, keepdims=True)
    w = (s - mn) / (mx - mn)
    return x * w[:, :, None, None]


if __name__ == "__main__":
    def run_case(B, C, patch):
        key = jax.random.PRNGKey(0)
        k1, k2, k3, k4, kx = jax.random.split(key, 5)
        conv1d_w = jax.random.normal(k1, (1, 1, 7), jnp.float32) * 0.3
        conv1d_b = jax.random.normal(k2, (1,), jnp.float32) * 0.1
        fc_w = jax.random.normal(k3, (C, C), jnp.float32) * (1.0 / jnp.sqrt(C))
        fc_b = jax.random.normal(k4, (C,), jnp.float32) * 0.1
        x = jax.random.normal(kx, (B, C, patch, patch), jnp.float32)

        out = jax.block_until_ready(
            abw_basic_block(x, conv1d_w, conv1d_b, fc_w, fc_b))
        ref = _ref_forward(x, conv1d_w, conv1d_b, fc_w, fc_b)
        assert out.shape == x.shape
        # approx reciprocal in the min-max normalization -> slightly looser tol
        assert jnp.allclose(out, ref, rtol=5e-3, atol=5e-3), \
            f"mismatch vs JAX reference (B={B}, C={C}, patch={patch})"

    run_case(B=2, C=16, patch=16)   # HW = 256: lane-dense (multiple of 128)
    run_case(B=2, C=16, patch=11)   # module-default patch_size = 11 (HW = 121)
    run_case(B=4, C=64, patch=16)   # wider channel dim, still single-tile/batch
    print("KERNEL_OK")
</pallas_src>

<mosaic_0001>
module attributes {stable_mosaic.version = 11 : i64} {
  func.func @_abw_kernel(%arg0: i32, %arg1: memref<8xf32, #tpu.memory_space<smem>>, %arg2: memref<1x16x256xf32, #tpu.memory_space<vmem>>, %arg3: memref<16x16xf32, #tpu.memory_space<vmem>>, %arg4: memref<1x16xf32, #tpu.memory_space<vmem>>, %arg5: memref<1x16x256xf32, #tpu.memory_space<vmem>>, %arg6: memref<1x22xf32, #tpu.memory_space<vmem>>) attributes {dimension_semantics = [#tpu.dimension_semantics<parallel>], iteration_bounds = array<i64: 2>, scalar_prefetch = 0 : i64, scratch_operands = 1 : i64, tpu.core_type = #tpu.core_type<tc>, window_params = [{transform_indices = @transform_0, window_bounds = array<i64: 8>}, {transform_indices = @transform_1, window_bounds = array<i64: 1, 16, 256>}, {pipeline_mode = #tpu.pipeline_mode<synchronous>, transform_indices = @transform_2, window_bounds = array<i64: 16, 16>}, {pipeline_mode = #tpu.pipeline_mode<synchronous>, transform_indices = @transform_3, window_bounds = array<i64: 1, 16>}, {transform_indices = @transform_4, window_bounds = array<i64: 1, 16, 256>}]} {
    %c0 = arith.constant 0 : index
    %c0_0 = arith.constant 0 : index
    %c0_1 = arith.constant 0 : index
    %0 = vector.load %arg2[%c0, %c0_0, %c0_1] : memref<1x16x256xf32, #tpu.memory_space<vmem>>, vector<1x16x256xf32>
    %cst = arith.constant dense<0.000000e+00> : vector<1x16xf32>
    %1 = vector.multi_reduction <add>, %0, %cst [2] : vector<1x16x256xf32> to vector<1x16xf32>
    %cst_2 = arith.constant 3.906250e-03 : f32
    %2 = vector.broadcast %cst_2 : f32 to vector<1x16xf32>
    %3 = arith.mulf %1, %2 : vector<1x16xf32>
    %cst_3 = arith.constant 0.000000e+00 : f32
    %4 = vector.broadcast %cst_3 : f32 to vector<1x22xf32>
    %c0_4 = arith.constant 0 : index
    %c0_5 = arith.constant 0 : index
    %5 = vector.load %arg6[%c0_4, %c0_5] : memref<1x22xf32, #tpu.memory_space<vmem>>, vector<1x22xf32>
    tpu.vector_store %arg6[%c0_4, %c0_5], %4 {strides = array<i32>} : memref<1x22xf32, #tpu.memory_space<vmem>>, vector<1x22xf32>,
    %c0_6 = arith.constant 0 : index
    %c3 = arith.constant 3 : index
    %6 = vector.load %arg6[%c0_6, %c3] : memref<1x22xf32, #tpu.memory_space<vmem>>, vector<1x16xf32>
    tpu.vector_store %arg6[%c0_6, %c3], %3 {strides = array<i32>} : memref<1x22xf32, #tpu.memory_space<vmem>>, vector<1x16xf32>,
    %c7 = arith.constant 7 : index
    %7 = memref.load %arg1[%c7] : memref<8xf32, #tpu.memory_space<smem>>
    %cst_7 = arith.constant 0.000000e+00 : f32
    %8 = vector.broadcast %cst_7 : f32 to vector<1x16xf32>
    %9 = vector.broadcast %7 : f32 to vector<1x16xf32>
    %10 = arith.addf %9, %8 : vector<1x16xf32>
    %c0_8 = arith.constant 0 : index
    %11 = memref.load %arg1[%c0_8] : memref<8xf32, #tpu.memory_space<smem>>
    %c0_9 = arith.constant 0 : index
    %c0_10 = arith.constant 0 : index
    %12 = vector.load %arg6[%c0_9, %c0_10] : memref<1x22xf32, #tpu.memory_space<vmem>>, vector<1x16xf32>
    %13 = vector.broadcast %11 : f32 to vector<1x16xf32>
    %14 = arith.mulf %13, %12 : vector<1x16xf32>
    %15 = arith.addf %10, %14 : vector<1x16xf32>
    %c1 = arith.constant 1 : index
    %16 = memref.load %arg1[%c1] : memref<8xf32, #tpu.memory_space<smem>>
    %c0_11 = arith.constant 0 : index
    %c1_12 = arith.constant 1 : index
    %17 = vector.load %arg6[%c0_11, %c1_12] : memref<1x22xf32, #tpu.memory_space<vmem>>, vector<1x16xf32>
    %18 = vector.broadcast %16 : f32 to vector<1x16xf32>
    %19 = arith.mulf %18, %17 : vector<1x16xf32>
    %20 = arith.addf %15, %19 : vector<1x16xf32>
    %c2 = arith.constant 2 : index
    %21 = memref.load %arg1[%c2] : memref<8xf32, #tpu.memory_space<smem>>
    %c0_13 = arith.constant 0 : index
    %c2_14 = arith.constant 2 : index
    %22 = vector.load %arg6[%c0_13, %c2_14] : memref<1x22xf32, #tpu.memory_space<vmem>>, vector<1x16xf32>
    %23 = vector.broadcast %21 : f32 to vector<1x16xf32>
    %24 = arith.mulf %23, %22 : vector<1x16xf32>
    %25 = arith.addf %20, %24 : vector<1x16xf32>
    %c3_15 = arith.constant 3 : index
    %26 = memref.load %arg1[%c3_15] : memref<8xf32, #tpu.memory_space<smem>>
    %c0_16 = arith.constant 0 : index
    %c3_17 = arith.constant 3 : index
    %27 = vector.load %arg6[%c0_16, %c3_17] : memref<1x22xf32, #tpu.memory_space<vmem>>, vector<1x16xf32>
    %28 = vector.broadcast %26 : f32 to vector<1x16xf32>
    %29 = arith.mulf %28, %27 : vector<1x16xf32>
    %30 = arith.addf %25, %29 : vector<1x16xf32>
    %c4 = arith.constant 4 : index
    %31 = memref.load %arg1[%c4] : memref<8xf32, #tpu.memory_space<smem>>
    %c0_18 = arith.constant 0 : index
    %c4_19 = arith.constant 4 : index
    %32 = vector.load %arg6[%c0_18, %c4_19] : memref<1x22xf32, #tpu.memory_space<vmem>>, vector<1x16xf32>
    %33 = vector.broadcast %31 : f32 to vector<1x16xf32>
    %34 = arith.mulf %33, %32 : vector<1x16xf32>
    %35 = arith.addf %30, %34 : vector<1x16xf32>
    %c5 = arith.constant 5 : index
    %36 = memref.load %arg1[%c5] : memref<8xf32, #tpu.memory_space<smem>>
    %c0_20 = arith.constant 0 : index
    %c5_21 = arith.constant 5 : index
    %37 = vector.load %arg6[%c0_20, %c5_21] : memref<1x22xf32, #tpu.memory_space<vmem>>, vector<1x16xf32>
    %38 = vector.broadcast %36 : f32 to vector<1x16xf32>
    %39 = arith.mulf %38, %37 : vector<1x16xf32>
    %40 = arith.addf %35, %39 : vector<1x16xf32>
    %c6 = arith.constant 6 : index
    %41 = memref.load %arg1[%c6] : memref<8xf32, #tpu.memory_space<smem>>
    %c0_22 = arith.constant 0 : index
    %c6_23 = arith.constant 6 : index
    %42 = vector.load %arg6[%c0_22, %c6_23] : memref<1x22xf32, #tpu.memory_space<vmem>>, vector<1x16xf32>
    %43 = vector.broadcast %41 : f32 to vector<1x16xf32>
    %44 = arith.mulf %43, %42 : vector<1x16xf32>
    %45 = arith.addf %40, %44 : vector<1x16xf32>
    %cst_24 = arith.constant 0.000000e+00 : f32
    %46 = vector.broadcast %cst_24 : f32 to vector<1x16xf32>
    %47 = arith.cmpf oge, %45, %46 : vector<1x16xf32>
    %cst_25 = arith.constant 0.00999999977 : f32
    %48 = vector.broadcast %cst_25 : f32 to vector<1x16xf32>
    %49 = arith.mulf %48, %45 : vector<1x16xf32>
    %50 = arith.select %47, %45, %49 : vector<1x16xi1>, vector<1x16xf32>
    %c0_26 = arith.constant 0 : index
    %c0_27 = arith.constant 0 : index
    %51 = vector.load %arg3[%c0_26, %c0_27] : memref<16x16xf32, #tpu.memory_space<vmem>>, vector<16x16xf32>
    %cst_28 = arith.constant dense<0.000000e+00> : vector<1x16xf32>
    %52 = tpu.matmul %50, %51, %cst_28 {dimension_numbers = #tpu.dot_dimension_numbers<[1], [0], [0], [1], [0, 0, 1, 1], [], []>} : vector<1x16xf32>, vector<16x16xf32>, vector<1x16xf32> -> vector<1x16xf32>
    %c0_29 = arith.constant 0 : index
    %c0_30 = arith.constant 0 : index
    %53 = vector.load %arg4[%c0_29, %c0_30] : memref<1x16xf32, #tpu.memory_space<vmem>>, vector<1x16xf32>
    %54 = arith.addf %52, %53 : vector<1x16xf32>
    %55 = arith.negf %54 : vector<1x16xf32>
    %56 = math.exp %55 : vector<1x16xf32>
    %cst_31 = arith.constant 1.000000e+00 : f32
    %57 = vector.broadcast %cst_31 : f32 to vector<1x16xf32>
    %58 = arith.addf %57, %56 : vector<1x16xf32>
    %59 = arith.divf %57, %58 : vector<1x16xf32>
    %cst_32 = arith.constant dense<0xFF800000> : vector<1xf32>
    %60 = vector.multi_reduction <maximumf>, %59, %cst_32 [1] : vector<1x16xf32> to vector<1xf32>
    %61 = vector.shape_cast %60 : vector<1xf32> to vector<1x1xf32>
    %cst_33 = arith.constant dense<0x7F800000> : vector<1xf32>
    %62 = vector.multi_reduction <minimumf>, %59, %cst_33 [1] : vector<1x16xf32> to vector<1xf32>
    %63 = vector.shape_cast %62 : vector<1xf32> to vector<1x1xf32>
    %64 = vector.broadcast %63 : vector<1x1xf32> to vector<1x16xf32>
    %65 = arith.subf %59, %64 : vector<1x16xf32>
    %66 = arith.subf %61, %63 : vector<1x1xf32>
    %67 = tpu.reciprocal %66 {approx = true} : vector<1x1xf32> -> vector<1x1xf32>
    %68 = vector.broadcast %67 : vector<1x1xf32> to vector<1x16xf32>
    %69 = arith.mulf %65, %68 : vector<1x16xf32>
    %70 = vector.shape_cast %69 : vector<1x16xf32> to vector<1x16x1xf32>
    %71 = vector.broadcast %70 : vector<1x16x1xf32> to vector<1x16x256xf32>
    %72 = arith.mulf %0, %71 : vector<1x16x256xf32>
    %c0_34 = arith.constant 0 : index
    %c0_35 = arith.constant 0 : index
    %c0_36 = arith.constant 0 : index
    %73 = vector.load %arg5[%c0_34, %c0_35, %c0_36] : memref<1x16x256xf32, #tpu.memory_space<vmem>>, vector<1x16x256xf32>
    tpu.vector_store %arg5[%c0_34, %c0_35, %c0_36], %72 {strides = array<i32>} : memref<1x16x256xf32, #tpu.memory_space<vmem>>, vector<1x16x256xf32>,
    return
  }
  func.func @transform_0(%arg0: i32) -> i32 {
    %c0_i32 = arith.constant 0 : i32
    %c0_i32_0 = arith.constant 0 : i32
    return %c0_i32 : i32
  }
  func.func @transform_1(%arg0: i32) -> (i32, i32, i32) {
    %c0_i32 = arith.constant 0 : i32
    %c0_i32_0 = arith.constant 0 : i32
    %c0_i32_1 = arith.constant 0 : i32
    return %arg0, %c0_i32, %c0_i32_0 : i32, i32, i32
  }
  func.func @transform_2(%arg0: i32) -> (i32, i32) {
    %c0_i32 = arith.constant 0 : i32
    %c0_i32_0 = arith.constant 0 : i32
    %c0_i32_1 = arith.constant 0 : i32
    return %c0_i32, %c0_i32_0 : i32, i32
  }
  func.func @transform_3(%arg0: i32) -> (i32, i32) {
    %c0_i32 = arith.constant 0 : i32
    %c0_i32_0 = arith.constant 0 : i32
    %c0_i32_1 = arith.constant 0 : i32
    return %c0_i32, %c0_i32_0 : i32, i32
  }
  func.func @transform_4(%arg0: i32) -> (i32, i32, i32) {
    %c0_i32 = arith.constant 0 : i32
    %c0_i32_0 = arith.constant 0 : i32
    %c0_i32_1 = arith.constant 0 : i32
    return %arg0, %c0_i32, %c0_i32_0 : i32, i32, i32
  }
}

</mosaic_0001>

<llo_original>
// kernel: tpu_custom_call.1
$region0: #{tpu_custom_call.1}
  #allocation0 [shape = 'u32[]', space=smem, size = 0x4, offset = 0x4, fixed_abs, tag = 'smem constant byte address 0x4 - core index']
  #allocation1 [shape = 'u32[144,128]{1,0:T(1,128)}', space=vmem, size = 0x12000, scoped, tag = 'internal scratch']
  #allocation2 [shape = 'f32[1,22]{1,0:T(1,128)}', space=vmem, size = 0x200, scoped, tag = 'scratch operand']
  %s0 = inlined_call_operand.hbm [shape: f32[8], index: 0, kind: input, shape index: {}]
  %s1 = inlined_call_operand.hbm [shape: f32[2,16,256], index: 1, kind: input, shape index: {}]
  %s2 = inlined_call_operand.hbm [shape: f32[16,16], index: 2, kind: input, shape index: {}]
  %s3 = inlined_call_operand.vmem [shape: f32[1,16], index: 3, kind: input, shape index: {}]
  %s4 = inlined_call_operand.hbm [shape: f32[2,16,256], index: 4, kind: output, shape index: {}]
  %s5 = sld [smem:[#allocation0]]
  $region61: #{tpu_custom_call.1} parent=0
    _
  %s7 = ssub.s32 1, %s5
  %s8 = scalar_select 0, %s7, %s5
  $region1: #{tpu_custom_call.1} parent=0
    #allocation3 [shape = 'u8[512]{0}', space=smem, size = 0x200, scoped, tag = 'input window, operand 0, single buffered']
    #allocation4 [shape = 's32[2]{0}', space=sflag, size = 0x8, scoped, tag = 'scoped memory for tpu_custom_call.1']
    #allocation5 [shape = 's32[2]{0}', space=sflag, size = 0x8, scoped, tag = 'scoped memory for tpu_custom_call.1']
    #allocation6 [shape = 's32[2]{0}', space=sflag, size = 0x8, scoped, tag = 'scoped memory for tpu_custom_call.1']
    #allocation7 [shape = 'u8[32768]{0}', space=vmem, size = 0x8000, scoped, tag = 'input window, operand 1']
    #allocation8 [shape = 'u8[8192]{0}', space=vmem, size = 0x2000, scoped, tag = 'input window, operand 2, single buffered']
    #allocation9 [shape = 's32[1]{0}', space=sflag, size = 0x4, scoped, tag = 'scoped memory for tpu_custom_call.1']
    #allocation10 [shape = 'u8[32768]{0}', space=vmem, size = 0x8000, scoped, tag = 'output window, operand 0']
    %9 = vsyncpa [#allocation6], 0
    %10 = vsyncpa [#allocation4], 0
    %s11 = scalar_lea.sflag [#allocation4], 1
    %12 = vsyncpa %s11, 0
    %13 = vsyncpa [#allocation9], 0
    %14 = vsyncpa [#allocation5], 0
    %s15 = scalar_lea.sflag [#allocation5], 1
    %16 = vsyncpa %s15, 0
    loop: start=0, step=1, limit=4
    $region2: #{tpu_custom_call.1} parent=1 // loop_pre_header
      _
    $region3: #{tpu_custom_call.1} parent=1 // loop_header
      %s18 = sphi 0, %s22
      %p19 = scmp.ge.s32.totalorder %s18, 4
      %s26 = sphi 0, %s26
      %s28 = sphi 0, %s26
      %s29 = sphi 0, %s28
      %s43 = sphi 0, %s29
      %s49 = sphi 0, %s51
      %s52 = sphi 0, %s49
      %s53 = sphi 0, %s52
      %s69 = sphi 0, %s53
      %s73 = sphi 0, %s73
      %s75 = sphi 0, %s73
      %s76 = sphi 0, %s75
      %s90 = sphi 0, %s76
      %s94 = sphi 0, %s94
      %s96 = sphi 0, %s94
      %s97 = sphi 0, %s96
      %s111 = sphi 0, %s97
      %s117 = sphi 0, %s119
      %s120 = sphi 0, %s117
      %s121 = sphi 0, %s120
      %s137 = sphi 0, %s121
    $region4: #{tpu_custom_call.1} parent=1 // loop_header_branch
      %21 = sbr.rel (%p19) target = $region8
    $region5: #{tpu_custom_call.1} parent=1 // loop_body
      %s23 = ssub.s32 %s18, 1
      %s24 = ssub.s32 %s18, 2
      %s25 = sadd.s32 %s18, 1
      %s27 = sadd.s32 %s26, 1
      %p30 = scmp.eq.s32.totalorder %s18, 1
      %p31 = scmp.ne.s32.totalorder %s26, %s28
      %p32 = scmp.eq.s32.totalorder %s18, 0
      %p33 = por %p31, %p32
      %p34 = scmp.ne.s32.totalorder %s26, %s28
      %p35 = scmp.eq.s32.totalorder %s23, 1
      %p36 = por %p34, %p35
      %p37 = scmp.ne.s32.totalorder %s28, %s29
      %p38 = scmp.eq.s32.totalorder %s23, 0
      %p39 = por %p37, %p38
      %p40 = scmp.ne.s32.totalorder %s28, %s29
      %p41 = scmp.eq.s32.totalorder %s24, 1
      %p42 = por %p40, %p41
      %p44 = scmp.ne.s32.totalorder %s29, %s43
      %p45 = scmp.eq.s32.totalorder %s24, 0
      %p46 = por %p44, %p45
      %s47 = ssub.s32 %s18, %s25
      %p48 = scmp.eq.s32.totalorder %s47, 0
      %s50 = sadd.s32 %s49, 1
      %s51 = scalar_select %p48, %s49, %s50
      %p54 = pneg %p48
      %p55 = scmp.eq.s32.totalorder %s18, 1
      %p56 = por %p54, %p55
      %p57 = scmp.ne.s32.totalorder %s49, %s52
      %p58 = scmp.eq.s32.totalorder %s18, 0
      %p59 = por %p57, %p58
      %p60 = scmp.ne.s32.totalorder %s49, %s52
      %p61 = scmp.eq.s32.totalorder %s23, 1
      %p62 = por %p60, %p61
      %p63 = scmp.ne.s32.totalorder %s52, %s53
      %p64 = scmp.eq.s32.totalorder %s23, 0
      %p65 = por %p63, %p64
      %p66 = scmp.ne.s32.totalorder %s52, %s53
      %p67 = scmp.eq.s32.totalorder %s24, 1
      %p68 = por %p66, %p67
      %p70 = scmp.ne.s32.totalorder %s53, %s69
      %p71 = scmp.eq.s32.totalorder %s24, 0
      %p72 = por %p70, %p71
      %s74 = sadd.s32 %s73, 1
      %p77 = scmp.eq.s32.totalorder %s18, 1
      %p78 = scmp.ne.s32.totalorder %s73, %s75
      %p79 = scmp.eq.s32.totalorder %s18, 0
      %p80 = por %p78, %p79
      %p81 = scmp.ne.s32.totalorder %s73, %s75
      %p82 = scmp.eq.s32.totalorder %s23, 1
      %p83 = por %p81, %p82
      %p84 = scmp.ne.s32.totalorder %s75, %s76
      %p85 = scmp.eq.s32.totalorder %s23, 0
      %p86 = por %p84, %p85
      %p87 = scmp.ne.s32.totalorder %s75, %s76
      %p88 = scmp.eq.s32.totalorder %s24, 1
      %p89 = por %p87, %p88
      %p91 = scmp.ne.s32.totalorder %s76, %s90
      %p92 = scmp.eq.s32.totalorder %s24, 0
      %p93 = por %p91, %p92
      %s95 = sadd.s32 %s94, 1
      %p98 = scmp.eq.s32.totalorder %s18, 1
      %p99 = scmp.ne.s32.totalorder %s94, %s96
      %p100 = scmp.eq.s32.totalorder %s18, 0
      %p101 = por %p99, %p100
      %p102 = scmp.ne.s32.totalorder %s94, %s96
      %p103 = scmp.eq.s32.totalorder %s23, 1
      %p104 = por %p102, %p103
      %p105 = scmp.ne.s32.totalorder %s96, %s97
      %p106 = scmp.eq.s32.totalorder %s23, 0
      %p107 = por %p105, %p106
      %p108 = scmp.ne.s32.totalorder %s96, %s97
      %p109 = scmp.eq.s32.totalorder %s24, 1
      %p110 = por %p108, %p109
      %p112 = scmp.ne.s32.totalorder %s97, %s111
      %p113 = scmp.eq.s32.totalorder %s24, 0
      %p114 = por %p112, %p113
      %s115 = ssub.s32 %s18, %s25
      %p116 = scmp.eq.s32.totalorder %s115, 0
      %s118 = sadd.s32 %s117, 1
      %s119 = scalar_select %p116, %s117, %s118
      %p122 = pneg %p116
      %p123 = scmp.eq.s32.totalorder %s18, 1
      %p124 = por %p122, %p123
      %p125 = scmp.ne.s32.totalorder %s117, %s120
      %p126 = scmp.eq.s32.totalorder %s18, 0
      %p127 = por %p125, %p126
      %p128 = scmp.ne.s32.totalorder %s117, %s120
      %p129 = scmp.eq.s32.totalorder %s23, 1
      %p130 = por %p128, %p129
      %p131 = scmp.ne.s32.totalorder %s120, %s121
      %p132 = scmp.eq.s32.totalorder %s23, 0
      %p133 = por %p131, %p132
      %p134 = scmp.ne.s32.totalorder %s120, %s121
      %p135 = scmp.eq.s32.totalorder %s24, 1
      %p136 = por %p134, %p135
      %p138 = scmp.ne.s32.totalorder %s121, %s137
      %p139 = scmp.eq.s32.totalorder %s24, 0
      %p140 = por %p138, %p139
      %p141 = scmp.le.s32.totalorder 1, %s18
      %p142 = scmp.lt.s32.totalorder %s18, 3
      %p143 = pnand %p141, %p142
      %p144 = pneg %p143
      // Predicated region
      $region9: #{tpu_custom_call.1} parent=5 // pred_check
        _
      $region10: #{tpu_custom_call.1} parent=5 // pred_check_branch
        %146 = sbr.rel (%p143) target = $region12
      $region11: #{tpu_custom_call.1} parent=5 // pred_region
        %s147 = ssub.s32 %s18, 1
        // Predicated region
        $region13: #{tpu_custom_call.1} parent=11 // pred_check
          %p148 = pneg %p39
        $region14: #{tpu_custom_call.1} parent=11 // pred_check_branch
          %150 = sbr.rel (%p148) target = $region16
        $region15: #{tpu_custom_call.1} parent=11 // pred_region
          %s152 = ssub.s32 16, 16
          %153 = vsyncadd [#allocation6], %s152
          %156 = dma.hbm_to_smem %s0, 16, [#allocation3], [#allocation6]
        $region16: #{tpu_custom_call.1} parent=11 // pred_fallthru
          _
        // Predicated region
        $region17: #{tpu_custom_call.1} parent=11 // pred_check
          %p157 = pneg %p86
        $region18: #{tpu_custom_call.1} parent=11 // pred_check_branch
          %159 = sbr.rel (%p157) target = $region20
        $region19: #{tpu_custom_call.1} parent=11 // pred_region
          %s161 = ssub.s32 256, 256
          %162 = vsyncadd [#allocation9], %s161
          %s163 = sshll.u32 [#allocation8], 4
          %s164 = int_to_ptr.vmem [resolvable:$true] %s163
          %169 = dma.hbm_to_vmem [thread:$0]  %s2, 256, %s164, [#allocation9], 128, 128, 8
        $region20: #{tpu_custom_call.1} parent=11 // pred_fallthru
          _
        // Predicated region
        $region21: #{tpu_custom_call.1} parent=11 // pred_check
          %p170 = pneg %p107
        $region22: #{tpu_custom_call.1} parent=11 // pred_check_branch
          %172 = sbr.rel (%p170) target = $region24
        $region23: #{tpu_custom_call.1} parent=11 // pred_region
          _
        $region24: #{tpu_custom_call.1} parent=11 // pred_fallthru
          _
      $region12: #{tpu_custom_call.1} parent=5 // pred_fallthru
        _
      %p173 = scmp.lt.s32.totalorder %s18, 2
      // Predicated region
      $region25: #{tpu_custom_call.1} parent=5 // pred_check
        %p174 = pneg %p173
      $region26: #{tpu_custom_call.1} parent=5 // pred_check_branch
        %176 = sbr.rel (%p174) target = $region28
      $region27: #{tpu_custom_call.1} parent=5 // pred_region
        // Predicated region
        $region29: #{tpu_custom_call.1} parent=27 // pred_check
          %p177 = pneg %p59
        $region30: #{tpu_custom_call.1} parent=27 // pred_check_branch
          %179 = sbr.rel (%p177) target = $region32
        $region31: #{tpu_custom_call.1} parent=27 // pred_region
          %s180 = sand.u32 %s49, 1
          %s181 = scalar_lea.sflag [#allocation4], %s180
          %s182 = sand.u32 %s49, 1
          %s183 = smul.addr %s182, 32
          %s184 = scalar_lea.vmem [#allocation7], %s183
          %s186 = ssub.s32 512, 512
          %187 = vsyncadd %s181, %s186
          %s188 = smul.addr %s18, 4
          %s189 = smul.addr %s188, 128
          %s190 = scalar_lea.hbm %s1, %s189
          %s191 = sshll.u32 %s184, 4
          %s192 = int_to_ptr.vmem [resolvable:$true] %s191
          %197 = dma.hbm_to_vmem [thread:$0]  %s190, 512, %s192, %s181, 256, 256, 16
        $region32: #{tpu_custom_call.1} parent=27 // pred_fallthru
          _
      $region28: #{tpu_custom_call.1} parent=5 // pred_fallthru
        _
      %p198 = scmp.le.s32.totalorder 1, %s18
      %p199 = scmp.lt.s32.totalorder %s18, 3
      %p200 = pnand %p198, %p199
      %p201 = pneg %p200
      // Predicated region
      $region33: #{tpu_custom_call.1} parent=5 // pred_check
        _
      $region34: #{tpu_custom_call.1} parent=5 // pred_check_branch
        %203 = sbr.rel (%p200) target = $region36
      $region35: #{tpu_custom_call.1} parent=5 // pred_region
        %s204 = ssub.s32 %s18, 1
        // Predicated region
        $region37: #{tpu_custom_call.1} parent=35 // pred_check
          %p205 = pneg %p39
        $region38: #{tpu_custom_call.1} parent=35 // pred_check_branch
          %207 = sbr.rel (%p205) target = $region40
        $region39: #{tpu_custom_call.1} parent=35 // pred_region
          %208 = dma.done [#allocation6], 16
        $region40: #{tpu_custom_call.1} parent=35 // pred_fallthru
          _
        %s209 = sand.u32 %s52, 1
        %s210 = scalar_lea.sflag [#allocation4], %s209
        %s211 = sand.u32 %s52, 1
        %s212 = smul.addr %s211, 32
        %s213 = scalar_lea.vmem [#allocation7], %s212
        // Predicated region
        $region41: #{tpu_custom_call.1} parent=35 // pred_check
          %p214 = pneg %p65
        $region42: #{tpu_custom_call.1} parent=35 // pred_check_branch
          %216 = sbr.rel (%p214) target = $region44
        $region43: #{tpu_custom_call.1} parent=35 // pred_region
          %217 = dma.done %s210, 512
        $region44: #{tpu_custom_call.1} parent=35 // pred_fallthru
          _
        // Predicated region
        $region45: #{tpu_custom_call.1} parent=35 // pred_check
          %p218 = pneg %p86
        $region46: #{tpu_custom_call.1} parent=35 // pred_check_branch
          %220 = sbr.rel (%p218) target = $region48
        $region47: #{tpu_custom_call.1} parent=35 // pred_region
          %221 = dma.done [#allocation9], 256
        $region48: #{tpu_custom_call.1} parent=35 // pred_fallthru
          _
        %222 = sfence
        %p223 = pneg %p39
        %p224 = pneg %p36
        %s225 = sand.u32 %s52, 1
        %s226 = scalar_lea.sflag [#allocation4], %s225
        %s227 = sand.u32 %s52, 1
        %s228 = smul.addr %s227, 32
        %s229 = scalar_lea.vmem [#allocation7], %s228
        %p230 = pneg %p65
        %p231 = pneg %p62
        %p232 = pneg %p86
        %p233 = pneg %p83
        %p234 = pneg %p107
        %p235 = pneg %p104
        %p236 = pneg %p133
        %p237 = pneg %p130
        %s238 = sand.u32 %s120, 1
        %s239 = scalar_lea.sflag [#allocation5], %s238
        %s240 = sand.u32 %s120, 1
        %s241 = smul.addr %s240, 32
        %s242 = scalar_lea.vmem [#allocation10], %s241
        %v243 = vld [vmem:[%s213] sm:$0xff]
        %v244 = vld [vmem:[%s213 + $0x8] sm:$0xff]
        %v245 = vld [vmem:[%s213 + $0x10] sm:$0xff]
        %v246 = vld [vmem:[%s213 + $0x18] sm:$0xff]
        %v247 = vadd.f32 %v243, %v244
        %248 = vadd.xlane.f32.xlu0 %v247
        %v249 = vpop.xlane.xlu0 %248
        %v250 = vadd.f32 %v245, %v246
        %251 = vadd.xlane.f32.xlu0 %v250
        %v252 = vpop.xlane.xlu0 %251
        %v253 = vmul.f32 %v249, 0.00390625
        %v254 = vmul.f32 %v252, 0.00390625
        %vm255 = vcmask 172032
        %256 = vst.msk [vmem:[#allocation2] sm:$0x1] %vm255, 0.0
        %v259 = vlaneseq
        %v260 = vand.u32 %v259, 127
        %v261 = vadd.s32 %v260, 4294967293
        %v262 = vlaneseq
        %v263 = vshrl.u32 %v262, 7
        %v264 = vsub.s32 %v261, %v263
        %v265 = vrot.slane %v253, %v264
        %v266 = vadd.s32 %v260, 4294967285
        %v267 = vlaneseq
        %v268 = vshrl.u32 %v267, 7
        %v269 = vsub.s32 %v266, %v268
        %v270 = vrot.slane %v254, %v269
        %vm271 = vcmask 154712
        %v272 = vsel %vm271, %v270, %v265
        %vm274 = vcmask 147480
        %275 = vst.msk [vmem:[#allocation2] sm:$0x1] %vm274, %v272
        %s276 = sld [smem:[#allocation3 + $0x7]]
        %v277 = vstv %s276
        %v278 = vadd.f32 %v277, 0.0
        %s279 = sld [smem:[#allocation3]]
        %v280 = vld [vmem:[#allocation2] sm:$0x1]
        %v281 = vstv %s279
        %v282 = vmul.f32 %v281, %v280
        %v283 = vadd.f32 %v278, %v282
        %s284 = sld [smem:[#allocation3 + $0x1]]
        %v285 = vstv %s284
        %v286 = vmul.f32 %v285, %v280
        %288 = vrot.lane.b32.xlu0 %v286, 127
        %v289 = vpop.permute.xlu0 %288
        %v291 = vadd.f32 %v283, %v289
        %s292 = sld [smem:[#allocation3 + $0x2]]
        %v293 = vstv %s292
        %v294 = vmul.f32 %v293, %v280
        %296 = vrot.lane.b32.xlu0 %v294, 126
        %v297 = vpop.permute.xlu0 %296
        %v299 = vadd.f32 %v291, %v297
        %s300 = sld [smem:[#allocation3 + $0x3]]
        %v301 = vstv %s300
        %v302 = vmul.f32 %v301, %v280
        %304 = vrot.lane.b32.xlu0 %v302, 125
        %v305 = vpop.permute.xlu0 %304
        %v307 = vadd.f32 %v299, %v305
        %s308 = sld [smem:[#allocation3 + $0x4]]
        %v309 = vstv %s308
        %v310 = vmul.f32 %v309, %v280
        %312 = vrot.lane.b32.xlu0 %v310, 124
        %v313 = vpop.permute.xlu0 %312
        %v315 = vadd.f32 %v307, %v313
        %s316 = sld [smem:[#allocation3 + $0x5]]
        %v317 = vstv %s316
        %v318 = vmul.f32 %v317, %v280
        %320 = vrot.lane.b32.xlu0 %v318, 123
        %v321 = vpop.permute.xlu0 %320
        %v323 = vadd.f32 %v315, %v321
        %s324 = sld [smem:[#allocation3 + $0x6]]
        %v325 = vstv %s324
        %v326 = vmul.f32 %v325, %v280
        %328 = vrot.lane.b32.xlu0 %v326, 122
        %v329 = vpop.permute.xlu0 %328
        %v331 = vadd.f32 %v323, %v329
        %vm332 = vcmp.ge.f32.partialorder %v331, 0.0
        %v333 = vmul.f32 %v331, 0.01
        %v334 = vsel %vm332, %v331, %v333
        %v335 = vld [vmem:[#allocation8] sm:$0xff]
        %v336 = vld [vmem:[#allocation8 + $0x8] sm:$0xff]
        %v337 = vld [vmem:[%s3] sm:$0x1]
        %vm338 = vcmask 130048
        %v340 = vsel %vm338, %v334, 0
        %342 = vmatprep.subr.mxu0 0.0
        %343 = vmatpush1.msra.mxu0 %v335
        %344 = vmatprep.subr.mxu0 0.0
        %345 = vmatpush1.msra.mxu0 %v336
        %346 = vmatprep.subr.mxu0 0.0
        %347 = vmatpush1.msra.mxu0 0.0
        %348 = vmatprep.subr.mxu0 0.0
        %349 = vmatpush1.msra.mxu0 0.0
        %350 = vmatprep.subr.mxu0 0.0
        %351 = vmatpush1.msra.mxu0 0.0
        %352 = vmatprep.subr.mxu0 0.0
        %353 = vmatpush1.msra.mxu0 0.0
        %354 = vmatprep.subr.mxu0 0.0
        %355 = vmatpush1.msra.mxu0 0.0
        %356 = vmatprep.subr.mxu0 0.0
        %357 = vmatpush1.msra.mxu0 0.0
        %358 = vmatprep.subr.mxu0 0.0
        %359 = vmatpush1.msra.mxu0 0.0
        %360 = vmatprep.subr.mxu0 0.0
        %361 = vmatpush1.msra.mxu0 0.0
        %362 = vmatprep.subr.mxu0 0.0
        %363 = vmatpush1.msra.mxu0 0.0
        %364 = vmatprep.subr.mxu0 0.0
        %365 = vmatpush1.msra.mxu0 0.0
        %366 = vmatprep.subr.mxu0 0.0
        %367 = vmatpush1.msra.mxu0 0.0
        %368 = vmatprep.subr.mxu0 0.0
        %369 = vmatpush1.msra.mxu0 0.0
        %370 = vmatprep.subr.mxu0 0.0
        %371 = vmatpush1.msra.mxu0 0.0
        %372 = vmatprep.subr.mxu0 0.0
        %373 = vmatpush1.msra.mxu0 0.0
        %374 = vmatprep.subr.mxu0 0.0
        %375 = vmatpush1.msra.mxu0 0.0
        %376 = vmatprep.subr.mxu0 0.0
        %377 = vmatpush1.msra.mxu0 0.0
        %378 = vmatprep.subr.mxu0 0.0
        %379 = vmatpush1.msra.mxu0 0.0
        %380 = vmatprep.subr.mxu0 0.0
        %381 = vmatpush1.msra.mxu0 0.0
        %382 = vmatprep.subr.mxu0 0.0
        %383 = vmatpush1.msra.mxu0 0.0
        %384 = vmatprep.subr.mxu0 0.0
        %385 = vmatpush1.msra.mxu0 0.0
        %386 = vmatprep.subr.mxu0 0.0
        %387 = vmatpush1.msra.mxu0 0.0
        %388 = vmatprep.subr.mxu0 0.0
        %389 = vmatpush1.msra.mxu0 0.0
        %390 = vmatprep.subr.mxu0 0.0
        %391 = vmatpush1.msra.mxu0 0.0
        %392 = vmatprep.subr.mxu0 0.0
        %393 = vmatpush1.msra.mxu0 0.0
        %394 = vmatprep.subr.mxu0 0.0
        %395 = vmatpush1.msra.mxu0 0.0
        %396 = vmatprep.subr.mxu0 0.0
        %397 = vmatpush1.msra.mxu0 0.0
        %398 = vmatprep.subr.mxu0 0.0
        %399 = vmatpush1.msra.mxu0 0.0
        %400 = vmatprep.subr.mxu0 0.0
        %401 = vmatpush1.msra.mxu0 0.0
        %402 = vmatprep.subr.mxu0 0.0
        %403 = vmatpush1.msra.mxu0 0.0
        %404 = vmatprep.subr.mxu0 0.0
        %405 = vmatpush1.msra.mxu0 0.0
        %406 = vmatprep.mubr.f32.mxu0 0.0
        %407 = vmatmul.mubr.f32.gmra.mrb[0].mxu0 %v340
        %v408 = vpop.f32.mrb[0].mxu0
        %v409 = vadd.f32 %v337, %v408
        %v410 = vpop.f32.mrb[0].mxu0
        %411 = vdwg.mxu0
        %v412 = vxor.u32 %v409, 2147483648
        %v413 = vmul.f32 %v412, 1.442695
        %v414 = vpow.pop %v413
        %v415 = vadd.f32 %v414, 1.0
        %v416 = vrcp.pop %v415
        %v417 = vmul.f32 1.0, %v416
        %vm418 = vcmask 122880
        %v419 = vsel %vm418, %v417, -inf
        %420 = vmax.xlane.f32.xlu0 %v419
        %v421 = vpop.xlane.xlu0 %420
        %v422 = vsel %vm418, %v417, inf
        %423 = vmin.xlane.f32.xlu0 %v422
        %v424 = vpop.xlane.xlu0 %423
        %v425 = vsub.f32 %v417, %v424
        %v426 = vsub.f32 %v421, %v424
        %v427 = vrcp.pop %v426
        %v428 = vmul.f32 %v425, %v427
        %v429 = vlaneseq
        %v430 = vshrl.u32 %v429, 7
        %v431 = vsub.s32 0, %v430
        %v432 = vrot.slane %v428, %v431
        %434 = vbcast.lane.b32.xlu0 %v432, 256
        %v435 = vpop.permute.xlu0 %434
        %s437 = sor.u32 256, 8
        %438 = vbcast.lane.b32.xlu0 %v432, %s437
        %v439 = vpop.permute.xlu0 %438
        %v440 = vmul.f32 %v243, %v435
        %v441 = vmul.f32 %v244, %v435
        %v442 = vmul.f32 %v245, %v439
        %v443 = vmul.f32 %v246, %v439
        %444 = vst [vmem:[%s242] sm:$0xff] %v440
        %445 = vst [vmem:[%s242 + $0x8] sm:$0xff] %v441
        %446 = vst [vmem:[%s242 + $0x10] sm:$0xff] %v442
        %447 = vst [vmem:[%s242 + $0x18] sm:$0xff] %v443
        %s448 = sand.u32 %s120, 1
        %s449 = scalar_lea.sflag [#allocation5], %s448
        %s450 = sand.u32 %s120, 1
        %s451 = smul.addr %s450, 32
        %s452 = scalar_lea.vmem [#allocation10], %s451
        // Predicated region
        $region49: #{tpu_custom_call.1} parent=35 // pred_check
          %p453 = pneg %p130
        $region50: #{tpu_custom_call.1} parent=35 // pred_check_branch
          %455 = sbr.rel (%p453) target = $region52
        $region51: #{tpu_custom_call.1} parent=35 // pred_region
          %s457 = ssub.s32 512, 512
          %458 = vsyncadd %s449, %s457
          %s459 = smul.addr %s23, 4
          %s460 = smul.addr %s459, 128
          %s461 = scalar_lea.hbm %s4, %s460
          %s462 = sshll.u32 %s452, 4
          %s463 = int_to_ptr.vmem [resolvable:$true] %s462
          %468 = dma.vmem_to_hbm [thread:$0]  %s463, 512, %s461, %s449, 256, 256, 16
        $region52: #{tpu_custom_call.1} parent=35 // pred_fallthru
          _
      $region36: #{tpu_custom_call.1} parent=5 // pred_fallthru
        _
      %p469 = scmp.le.s32.totalorder 2, %s18
      // Predicated region
      $region53: #{tpu_custom_call.1} parent=5 // pred_check
        %p470 = pneg %p469
      $region54: #{tpu_custom_call.1} parent=5 // pred_check_branch
        %472 = sbr.rel (%p470) target = $region56
      $region55: #{tpu_custom_call.1} parent=5 // pred_region
        %s473 = ssub.s32 %s18, 2
        // Predicated region
        $region57: #{tpu_custom_call.1} parent=55 // pred_check
          %p474 = pneg %p136
        $region58: #{tpu_custom_call.1} parent=55 // pred_check_branch
          %476 = sbr.rel (%p474) target = $region60
        $region59: #{tpu_custom_call.1} parent=55 // pred_region
          %s477 = sand.u32 %s121, 1
          %s478 = scalar_lea.sflag [#allocation5], %s477
          %s479 = sand.u32 %s121, 1
          %s480 = smul.addr %s479, 32
          %s481 = scalar_lea.vmem [#allocation10], %s480
          %482 = dma.done %s478, 512
        $region60: #{tpu_custom_call.1} parent=55 // pred_fallthru
          _
      $region56: #{tpu_custom_call.1} parent=5 // pred_fallthru
        _
    $region6: #{tpu_custom_call.1} parent=1 // loop_footer
      %s22 = sadd.s32 1, %s18
    $region7: #{tpu_custom_call.1} parent=1 // loop_footer_branch
      %17 = sbr.rel target = $region3
    $region8: #{tpu_custom_call.1} parent=1 // loop_exit
      _
    %483 = vsyncpa [#allocation4], 1
    %s484 = scalar_lea.sflag [#allocation4], 1
    %485 = vsyncpa %s484, 1
    %486 = vsyncpa [#allocation9], 1
    %487 = vsyncpa [#allocation5], 1
    %s488 = scalar_lea.sflag [#allocation5], 1
    %489 = vsyncpa %s488, 1
    %490 = vsyncpa [#allocation6], 1
    %s491 = scalar_lea.sflag [#allocation6], 1
    %492 = vsyncpa %s491, 1

</llo_original>
